<compile_context>
chip_gen: v5e
topology: v5e:2x2
jax: 0.10.0
libtpu: 0.0.40
codegen_flags: <defaults>
</compile_context>

<pallas_src>
import functools

import numpy as np
import jax
import jax.numpy as jnp
from jax.experimental import pallas as pl
from jax.experimental.pallas import tpu as pltpu


def _sublane_granule(dtype):
    """Dtype-aware row granule: 8 for f32, 16 for bf16, 32 for int8/fp8."""
    itemsize = jnp.dtype(dtype).itemsize
    return max(8, 32 // max(itemsize, 1))


def _row_chunking(B, dtype):
    """Split the row axis into up to two DMA chunks (one per v7x TensorCore).

    Returns (n_chunks, rows_per_chunk).  Chunk 1 is clamped to end at row B,
    so the union of chunks covers [0, B) exactly for any B.
    """
    granule = _sublane_granule(dtype)
    if B <= 2 * granule:
        return 1, B
    tb = -(-B // 2)                       # ceil(B / 2)
    tb = -(-tb // granule) * granule      # round up to the packing granule
    tb = min(tb, B)
    return 2, tb


def _dma_copy_kernel(x_hbm, o_hbm, sem, *, tb, rows):
    """One grid step = one HBM->HBM DMA of a tb-row slab (no VMEM staging)."""
    i = pl.program_id(0)
    # Clamp so the last chunk ends exactly at `rows`; overlapping rows are
    # rewritten with identical data (safe, no tearing).
    start = jnp.minimum(i * tb, rows - tb)
    cp = pltpu.make_async_copy(
        x_hbm.at[pl.ds(start, tb), :],
        o_hbm.at[pl.ds(start, tb), :],
        sem,
    )
    cp.start()
    cp.wait()


def _pallas_copy_2d(x):
    """Materialized (B, D) -> (B, D) copy as direct HBM->HBM DMA."""
    B, D = x.shape
    itemsize = jnp.dtype(x.dtype).itemsize
    n_chunks, tb = _row_chunking(B, x.dtype)
    kernel = functools.partial(_dma_copy_kernel, tb=tb, rows=B)
    return pl.pallas_call(
        kernel,
        out_shape=jax.ShapeDtypeStruct((B, D), x.dtype),
        grid=(n_chunks,),
        # Raw HBM refs on both sides: the TensorCore and VMEM are not on the
        # data path; the copy is purely HBM-bandwidth bound.
        in_specs=[pl.BlockSpec(memory_space=pl.ANY)],
        out_specs=pl.BlockSpec(memory_space=pl.ANY),
        scratch_shapes=[pltpu.SemaphoreType.DMA],
        compiler_params=pltpu.CompilerParams(
            # Independent row chunks -> shard across the two v7x TensorCores.
            dimension_semantics=("parallel",),
        ),
        cost_estimate=pl.CostEstimate(
            flops=0,
            transcendentals=0,
            bytes_accessed=2 * B * D * itemsize,
        ),
    )(x)


class UnflatData:
    """Pallas equivalent of Unflat_data: (B, D) -> (B, *shape_dim)."""

    def __init__(self, input_dimension):
        self.shape_dim = tuple(int(s) for s in input_dimension[0])

    def __call__(self, x, sample_the_data=False, materialize_copy=False):
        B, D = x.shape
        assert D == int(np.prod(self.shape_dim)), (
            "feature dim must equal prod(shape_dim)")
        if materialize_copy:
            # Explicitly requested fresh buffer: direct HBM->HBM DMA kernel.
            y = _pallas_copy_2d(x)
        else:
            # Top optimization from review: a contiguous view/reshape needs
            # no data movement at all — pure metadata op.
            y = x
        return jnp.reshape(y, (B, *self.shape_dim))


if __name__ == "__main__":
    key = jax.random.PRNGKey(0)

    # Shapes implied by the module: x is (B, D) with D = C*H*W.
    B, C, H, W = 2, 4, 16, 16
    D = C * H * W
    x = jax.random.normal(key, (B, D), dtype=jnp.float32)

    module = UnflatData(input_dimension=[(C, H, W)])
    ref = jnp.reshape(x, (B, C, H, W))

    # 1) Default (free metadata reshape) path.
    out_fast = jax.block_until_ready(module(x))
    assert out_fast.shape == ref.shape and out_fast.dtype == ref.dtype
    np.testing.assert_allclose(np.asarray(out_fast), np.asarray(ref),
                               rtol=0, atol=0)

    # 2) Pallas HBM->HBM DMA path (single-chunk case, B <= 2*granule).
    out_pallas = jax.block_until_ready(module(x, materialize_copy=True))
    assert out_pallas.shape == ref.shape and out_pallas.dtype == ref.dtype
    np.testing.assert_allclose(np.asarray(out_pallas), np.asarray(ref),
                               rtol=0, atol=0)

    # 3) Pallas path with B large enough to exercise the 2-chunk (dual-core)
    #    row split, including a non-multiple-of-granule tail.
    B2 = 28
    x2 = jax.random.normal(jax.random.PRNGKey(0), (B2, D), dtype=jnp.float32)
    out2 = jax.block_until_ready(module(x2, materialize_copy=True))
    ref2 = jnp.reshape(x2, (B2, C, H, W))
    np.testing.assert_allclose(np.asarray(out2), np.asarray(ref2),
                               rtol=0, atol=0)

    print("KERNEL_OK")
</pallas_src>

<mosaic_0001>
module attributes {stable_mosaic.version = 11 : i64} {
  func.func @_dma_copy_kernel(%arg0: i32, %arg1: memref<2x1024xf32, #tpu.memory_space<any>>, %arg2: memref<2x1024xf32, #tpu.memory_space<any>>, %arg3: memref<!tpu.dma_semaphore, #tpu.memory_space<semaphore_mem>>) attributes {dimension_semantics = [#tpu.dimension_semantics<parallel>], iteration_bounds = array<i64: 1>, scalar_prefetch = 0 : i64, scratch_operands = 1 : i64, tpu.core_type = #tpu.core_type<tc>, window_params = [{}, {}]} {
    %c2_i32 = arith.constant 2 : i32
    %0 = arith.muli %arg0, %c2_i32 : i32
    %c0_i32 = arith.constant 0 : i32
    %1 = arith.minsi %0, %c0_i32 : i32
    %c0_i32_0 = arith.constant 0 : i32
    %2 = tpu.memref_slice %arg1[%1, %c0_i32_0] : memref<2x1024xf32, #tpu.memory_space<any>> -> memref<2x1024xf32, #tpu.memory_space<any>>
    %c0_i32_1 = arith.constant 0 : i32
    %3 = tpu.memref_slice %arg2[%1, %c0_i32_1] : memref<2x1024xf32, #tpu.memory_space<any>> -> memref<2x1024xf32, #tpu.memory_space<any>>
    tpu.enqueue_dma source(%2 : memref<2x1024xf32, #tpu.memory_space<any>>) target(%3 : memref<2x1024xf32, #tpu.memory_space<any>>) target_semaphore(%arg3 : memref<!tpu.dma_semaphore, #tpu.memory_space<semaphore_mem>>)
    %c0_i32_2 = arith.constant 0 : i32
    %4 = tpu.memref_slice %arg1[%1, %c0_i32_2] : memref<2x1024xf32, #tpu.memory_space<any>> -> memref<2x1024xf32, #tpu.memory_space<any>>
    %c0_i32_3 = arith.constant 0 : i32
    %5 = tpu.memref_slice %arg2[%1, %c0_i32_3] : memref<2x1024xf32, #tpu.memory_space<any>> -> memref<2x1024xf32, #tpu.memory_space<any>>
    tpu.wait_dma2 semaphore(%arg3 : memref<!tpu.dma_semaphore, #tpu.memory_space<semaphore_mem>>) src(%4 : memref<2x1024xf32, #tpu.memory_space<any>>) dst(%5 : memref<2x1024xf32, #tpu.memory_space<any>>)
    return
  }
}

</mosaic_0001>

<llo_original>
// kernel: tpu_custom_call.1
$region0: #{tpu_custom_call.1}
  #allocation0 [shape = 'u32[]', space=smem, size = 0x4, offset = 0x4, fixed_abs, tag = 'smem constant byte address 0x4 - core index']
  #allocation1 [shape = 'u32[72,128]{1,0:T(1,128)}', space=vmem, size = 0x9000, scoped, tag = 'internal scratch']
  #allocation2 [shape = 's32[1]{0}', space=sflag, size = 0x4, scoped, tag = 'scratch operand']
  #allocation3 [shape = 's32[]', space=sflag, size = 0x4, offset = 0, fixed_abs, tag = 'sflag constant byte address 0x0 - dummy sync flag']
  #allocation4 [shape = 'u32[0]{0}', space=smem, size = 0, offset = 0, fixed_abs, tag = 'smem constant byte address 0x0 - null']
  %s0 = inlined_call_operand.hbm [shape: f32[2,1024], index: 0, kind: input, shape index: {}]
  %s1 = inlined_call_operand.hbm [shape: f32[2,1024], index: 1, kind: output, shape index: {}]
  %s2 = sld [smem:[#allocation0]]
  $region2: #{tpu_custom_call.1} parent=0
    _
  %s4 = ssub.s32 1, %s2
  %s5 = scalar_select 0, %s4, %s2
  %s6 = smul.u32 0, 2
  %p7 = scmp.lt.s32.totalorder %s6, 0
  %s8 = scalar_select %p7, %s6, 0
  %s9 = sshra.s32 %s8, 1
  %s10 = sand.u32 %s8, 1
  %s11 = smul.u32 %s9, 8
  %s12 = smul.addr %s11, 2
  %s13 = scalar_lea.hbm %s0, %s12
  %s14 = smul.addr %s11, 2
  %s15 = scalar_lea.hbm %s1, %s14
  %s17 = sshll.u32 1, 14
  %s18 = sxor.u32 4294967295, %s17
  %s20 = sshll.u32 %s13, 4
  %s21 = int_to_ptr.hbm [resolvable:$true] %s20
  %s22 = sshll.u32 %s15, 4
  %s23 = int_to_ptr.hbm [resolvable:$true] %s22
  %26 = dma.general %s21, 256, %s23, [#allocation2], [#allocation3], [#allocation4], 0, 0
  %s27 = smul.u32 2, 1
  %s28 = smul.u32 %s27, 8
  %s29 = sshll.u32 %s28, 4
  %30 = dma.done [#allocation2], %s29
  %31 = vsyncmov [#allocation2]
  %s32 = vpop.sfrf %31
  %p33 = scmp.eq.s32.totalorder %s32, 0
  %p34 = pneg %p33
  %36 = shalt.err (%p34)

</llo_original>
